<compile_context>
chip_gen: v5e
topology: v5e:2x2
jax: 0.10.0
libtpu: 0.0.40
codegen_flags: <defaults>
</compile_context>

<pallas_src>
import jax
import jax.numpy as jnp
from jax.experimental import pallas as pl
from jax.experimental.pallas import tpu as pltpu


def _round_up(x: int, m: int) -> int:
    return (x + m - 1) // m * m


def _mlp_fused_kernel(x_ref, w1_ref, b1_ref, w2_ref, b2_ref, o_ref, h_ref):
    """Fused Linear -> ReLU -> Linear for one (TM, Din) batch tile.

    x_ref : (TM, Din)    bf16    streamed per grid step
    w1_ref: (H, Din)     bf16    VMEM-resident (constant index_map)
    b1_ref: (1, H)       f32
    w2_ref: (Dout, H)    bf16
    b2_ref: (1, Dout)    f32
    o_ref : (TM, Dout)   out dtype
    h_ref : (TM, H)      f32 VMEM scratch (hidden activation, never hits HBM)
    """
    # Layer 1: x @ W1^T on the MXU, accumulate in f32 (contract last dims -> no transpose).
    h = jax.lax.dot_general(
        x_ref[...], w1_ref[...],
        dimension_numbers=(((1,), (1,)), ((), ())),
        preferred_element_type=jnp.float32,
    )
    # Bias + ReLU on the f32 accumulator (VPU, hidden under the matmuls).
    h_ref[...] = jnp.maximum(h + b1_ref[...], 0.0)

    # Layer 2: h @ W2^T on the MXU, f32 accumulation.
    y = jax.lax.dot_general(
        h_ref[...].astype(w2_ref.dtype), w2_ref[...],
        dimension_numbers=(((1,), (1,)), ((), ())),
        preferred_element_type=jnp.float32,
    )
    y = y + b2_ref[...]
    o_ref[...] = y.astype(o_ref.dtype)


def reparam_mlp_forward(x, flat_param, *, din, hidden, dout,
                        tm=256, compute_dtype=jnp.bfloat16):
    """ReparamModule.forward(x, flat_param=...) for a Linear->ReLU->Linear wrapped module."""
    # torch.squeeze(flat_param): accept (P,) or (1, P) etc.
    flat_param = jnp.reshape(flat_param, (-1,))

    # ---- unflatten in PyTorch named_parameters order (row-major views) ----
    o0 = 0
    w1 = flat_param[o0:o0 + hidden * din].reshape(hidden, din); o0 += hidden * din
    b1 = flat_param[o0:o0 + hidden];                            o0 += hidden
    w2 = flat_param[o0:o0 + dout * hidden].reshape(dout, hidden); o0 += dout * hidden
    b2 = flat_param[o0:o0 + dout]

    n = x.shape[0]
    out_dtype = x.dtype

    # ---- pad feature dims to lane-dense / MXU-friendly multiples of 128 ----
    din_p = _round_up(din, 128)
    h_p = _round_up(hidden, 128)
    dout_p = _round_up(dout, 128)
    tm = min(tm, _round_up(n, 8))          # batch tile (sublane-aligned)
    n_p = _round_up(n, tm)

    x_p = jnp.zeros((n_p, din_p), compute_dtype).at[:n, :din].set(x.astype(compute_dtype))
    w1_p = jnp.zeros((h_p, din_p), compute_dtype).at[:hidden, :din].set(w1.astype(compute_dtype))
    w2_p = jnp.zeros((dout_p, h_p), compute_dtype).at[:dout, :hidden].set(w2.astype(compute_dtype))
    b1_p = jnp.zeros((1, h_p), jnp.float32).at[0, :hidden].set(b1.astype(jnp.float32))
    b2_p = jnp.zeros((1, dout_p), jnp.float32).at[0, :dout].set(b2.astype(jnp.float32))

    grid = (n_p // tm,)
    itemsize = jnp.dtype(compute_dtype).itemsize
    flops = 2 * n_p * (din_p * h_p + h_p * dout_p)
    bytes_accessed = ((x_p.size + w1_p.size + w2_p.size) * itemsize
                      + (b1_p.size + b2_p.size) * 4
                      + n_p * dout_p * jnp.dtype(out_dtype).itemsize)

    out = pl.pallas_call(
        _mlp_fused_kernel,
        out_shape=jax.ShapeDtypeStruct((n_p, dout_p), out_dtype),
        grid=grid,
        in_specs=[
            pl.BlockSpec((tm, din_p), lambda i: (i, 0)),      # x: streamed per batch tile
            pl.BlockSpec((h_p, din_p), lambda i: (0, 0)),     # W1: VMEM-resident
            pl.BlockSpec((1, h_p), lambda i: (0, 0)),         # b1
            pl.BlockSpec((dout_p, h_p), lambda i: (0, 0)),    # W2
            pl.BlockSpec((1, dout_p), lambda i: (0, 0)),      # b2
        ],
        out_specs=pl.BlockSpec((tm, dout_p), lambda i: (i, 0)),
        scratch_shapes=[pltpu.VMEM((tm, h_p), jnp.float32)],  # hidden activation
        compiler_params=pltpu.CompilerParams(
            dimension_semantics=("parallel",),                # dual-TC sharding on v7x
            vmem_limit_bytes=48 * 1024 * 1024,
        ),
        cost_estimate=pl.CostEstimate(
            flops=flops, transcendentals=0, bytes_accessed=bytes_accessed),
    )(x_p, w1_p, b1_p, w2_p, b2_p)

    return out[:n, :dout]


def _reference(x, flat_param, din, hidden, dout, compute_dtype=jnp.bfloat16):
    """Pure-JAX reference with the same numerics (bf16 MXU operands, f32 accumulate)."""
    flat_param = jnp.reshape(flat_param, (-1,))
    o0 = 0
    w1 = flat_param[o0:o0 + hidden * din].reshape(hidden, din); o0 += hidden * din
    b1 = flat_param[o0:o0 + hidden];                            o0 += hidden
    w2 = flat_param[o0:o0 + dout * hidden].reshape(dout, hidden); o0 += dout * hidden
    b2 = flat_param[o0:o0 + dout]

    h = jax.lax.dot_general(
        x.astype(compute_dtype), w1.astype(compute_dtype),
        dimension_numbers=(((1,), (1,)), ((), ())),
        preferred_element_type=jnp.float32)
    h = jnp.maximum(h + b1.astype(jnp.float32)[None, :], 0.0)
    y = jax.lax.dot_general(
        h.astype(compute_dtype), w2.astype(compute_dtype),
        dimension_numbers=(((1,), (1,)), ((), ())),
        preferred_element_type=jnp.float32)
    y = y + b2.astype(jnp.float32)[None, :]
    return y.astype(x.dtype)


if __name__ == "__main__":
    # Small deterministic shapes consistent with the wrapped MLP.
    n, din, hidden, dout = 8, 32, 64, 16
    n_params = hidden * din + hidden + dout * hidden + dout  # 3152

    key = jax.random.PRNGKey(0)
    kx, kw = jax.random.split(key)
    x = jax.random.normal(kx, (n, din), jnp.float32)
    # (1, P) shape exercises the torch.squeeze(flat_param) path of ReparamModule.forward.
    flat_param = 0.1 * jax.random.normal(kw, (1, n_params), jnp.float32)

    y = reparam_mlp_forward(x, flat_param, din=din, hidden=hidden, dout=dout)
    y = jax.block_until_ready(y)

    y_ref = _reference(x, flat_param, din, hidden, dout)
    assert y.shape == (n, dout), y.shape
    max_err = float(jnp.max(jnp.abs(y - y_ref)))
    assert jnp.allclose(y, y_ref, rtol=1e-2, atol=1e-2), f"max abs err {max_err}"

    print("KERNEL_OK")
</pallas_src>

<mosaic_0001>
module attributes {stable_mosaic.version = 11 : i64} {
  func.func @_mlp_fused_kernel(%arg0: i32, %arg1: memref<8x128xbf16, #tpu.memory_space<vmem>>, %arg2: memref<128x128xbf16, #tpu.memory_space<vmem>>, %arg3: memref<1x128xf32, #tpu.memory_space<vmem>>, %arg4: memref<128x128xbf16, #tpu.memory_space<vmem>>, %arg5: memref<1x128xf32, #tpu.memory_space<vmem>>, %arg6: memref<8x128xf32, #tpu.memory_space<vmem>>, %arg7: memref<8x128xf32, #tpu.memory_space<vmem>>) attributes {dimension_semantics = [#tpu.dimension_semantics<parallel>], iteration_bounds = array<i64: 1>, scalar_prefetch = 0 : i64, scratch_operands = 1 : i64, tpu.core_type = #tpu.core_type<tc>, window_params = [{transform_indices = @transform_0, window_bounds = array<i64: 8, 128>}, {pipeline_mode = #tpu.pipeline_mode<synchronous>, transform_indices = @transform_1, window_bounds = array<i64: 128, 128>}, {pipeline_mode = #tpu.pipeline_mode<synchronous>, transform_indices = @transform_2, window_bounds = array<i64: 1, 128>}, {pipeline_mode = #tpu.pipeline_mode<synchronous>, transform_indices = @transform_3, window_bounds = array<i64: 128, 128>}, {pipeline_mode = #tpu.pipeline_mode<synchronous>, transform_indices = @transform_4, window_bounds = array<i64: 1, 128>}, {transform_indices = @transform_5, window_bounds = array<i64: 8, 128>}]} {
    %c0 = arith.constant 0 : index
    %c0_0 = arith.constant 0 : index
    %0 = vector.load %arg1[%c0, %c0_0] : memref<8x128xbf16, #tpu.memory_space<vmem>>, vector<8x128xbf16>
    %c0_1 = arith.constant 0 : index
    %c0_2 = arith.constant 0 : index
    %1 = vector.load %arg2[%c0_1, %c0_2] : memref<128x128xbf16, #tpu.memory_space<vmem>>, vector<128x128xbf16>
    %cst = arith.constant dense<0.000000e+00> : vector<8x128xf32>
    %2 = tpu.matmul %0, %1, %cst {dimension_numbers = #tpu.dot_dimension_numbers<[1], [1], [0], [0], [0, 0, 1, 0], [], []>} : vector<8x128xbf16>, vector<128x128xbf16>, vector<8x128xf32> -> vector<8x128xf32>
    %c0_3 = arith.constant 0 : index
    %c0_4 = arith.constant 0 : index
    %3 = vector.load %arg3[%c0_3, %c0_4] : memref<1x128xf32, #tpu.memory_space<vmem>>, vector<1x128xf32>
    %4 = vector.broadcast %3 : vector<1x128xf32> to vector<8x128xf32>
    %5 = arith.addf %2, %4 : vector<8x128xf32>
    %cst_5 = arith.constant 0.000000e+00 : f32
    %6 = vector.broadcast %cst_5 : f32 to vector<8x128xf32>
    %7 = arith.maximumf %5, %6 : vector<8x128xf32>
    %c0_6 = arith.constant 0 : index
    %c0_7 = arith.constant 0 : index
    %8 = vector.load %arg7[%c0_6, %c0_7] : memref<8x128xf32, #tpu.memory_space<vmem>>, vector<8x128xf32>
    tpu.vector_store %arg7[%c0_6, %c0_7], %7 {strides = array<i32>} : memref<8x128xf32, #tpu.memory_space<vmem>>, vector<8x128xf32>,
    %c0_8 = arith.constant 0 : index
    %c0_9 = arith.constant 0 : index
    %9 = vector.load %arg7[%c0_8, %c0_9] : memref<8x128xf32, #tpu.memory_space<vmem>>, vector<8x128xf32>
    %10 = arith.truncf %9 : vector<8x128xf32> to vector<8x128xbf16>
    %c0_10 = arith.constant 0 : index
    %c0_11 = arith.constant 0 : index
    %11 = vector.load %arg4[%c0_10, %c0_11] : memref<128x128xbf16, #tpu.memory_space<vmem>>, vector<128x128xbf16>
    %cst_12 = arith.constant dense<0.000000e+00> : vector<8x128xf32>
    %12 = tpu.matmul %10, %11, %cst_12 {dimension_numbers = #tpu.dot_dimension_numbers<[1], [1], [0], [0], [0, 0, 1, 0], [], []>} : vector<8x128xbf16>, vector<128x128xbf16>, vector<8x128xf32> -> vector<8x128xf32>
    %c0_13 = arith.constant 0 : index
    %c0_14 = arith.constant 0 : index
    %13 = vector.load %arg5[%c0_13, %c0_14] : memref<1x128xf32, #tpu.memory_space<vmem>>, vector<1x128xf32>
    %14 = vector.broadcast %13 : vector<1x128xf32> to vector<8x128xf32>
    %15 = arith.addf %12, %14 : vector<8x128xf32>
    %c0_15 = arith.constant 0 : index
    %c0_16 = arith.constant 0 : index
    %16 = vector.load %arg6[%c0_15, %c0_16] : memref<8x128xf32, #tpu.memory_space<vmem>>, vector<8x128xf32>
    tpu.vector_store %arg6[%c0_15, %c0_16], %15 {strides = array<i32>} : memref<8x128xf32, #tpu.memory_space<vmem>>, vector<8x128xf32>,
    return
  }
  func.func @transform_0(%arg0: i32) -> (i32, i32) {
    %c0_i32 = arith.constant 0 : i32
    %c0_i32_0 = arith.constant 0 : i32
    return %arg0, %c0_i32 : i32, i32
  }
  func.func @transform_1(%arg0: i32) -> (i32, i32) {
    %c0_i32 = arith.constant 0 : i32
    %c0_i32_0 = arith.constant 0 : i32
    %c0_i32_1 = arith.constant 0 : i32
    return %c0_i32, %c0_i32_0 : i32, i32
  }
  func.func @transform_2(%arg0: i32) -> (i32, i32) {
    %c0_i32 = arith.constant 0 : i32
    %c0_i32_0 = arith.constant 0 : i32
    %c0_i32_1 = arith.constant 0 : i32
    return %c0_i32, %c0_i32_0 : i32, i32
  }
  func.func @transform_3(%arg0: i32) -> (i32, i32) {
    %c0_i32 = arith.constant 0 : i32
    %c0_i32_0 = arith.constant 0 : i32
    %c0_i32_1 = arith.constant 0 : i32
    return %c0_i32, %c0_i32_0 : i32, i32
  }
  func.func @transform_4(%arg0: i32) -> (i32, i32) {
    %c0_i32 = arith.constant 0 : i32
    %c0_i32_0 = arith.constant 0 : i32
    %c0_i32_1 = arith.constant 0 : i32
    return %c0_i32, %c0_i32_0 : i32, i32
  }
  func.func @transform_5(%arg0: i32) -> (i32, i32) {
    %c0_i32 = arith.constant 0 : i32
    %c0_i32_0 = arith.constant 0 : i32
    return %arg0, %c0_i32 : i32, i32
  }
}

</mosaic_0001>

<llo_original>
// kernel: tpu_custom_call.1
$region0: #{tpu_custom_call.1}
  #allocation0 [shape = 'u32[]', space=smem, size = 0x4, offset = 0x4, fixed_abs, tag = 'smem constant byte address 0x4 - core index']
  #allocation1 [shape = 'u32[72,128]{1,0:T(1,128)}', space=vmem, size = 0x9000, scoped, tag = 'internal scratch']
  #allocation2 [shape = 'f32[8,128]{1,0:T(8,128)}', space=vmem, size = 0x1000, scoped, tag = 'scratch operand']
  %s0 = inlined_call_operand.hbm [shape: bf16[8,128], index: 0, kind: input, shape index: {}]
  %s1 = inlined_call_operand.hbm [shape: bf16[128,128], index: 1, kind: input, shape index: {}]
  %s2 = inlined_call_operand.vmem [shape: f32[1,128], index: 2, kind: input, shape index: {}]
  %s3 = inlined_call_operand.hbm [shape: bf16[128,128], index: 3, kind: input, shape index: {}]
  %s4 = inlined_call_operand.vmem [shape: f32[1,128], index: 4, kind: input, shape index: {}]
  %s5 = inlined_call_operand.hbm [shape: f32[8,128], index: 5, kind: output, shape index: {}]
  %s6 = sld [smem:[#allocation0]]
  $region42: #{tpu_custom_call.1} parent=0
    _
  %s8 = ssub.s32 1, %s6
  %s9 = scalar_select 0, %s8, %s6
  $region1: #{tpu_custom_call.1} parent=0
    #allocation3 [shape = 'u8[2048]{0}', space=vmem, size = 0x800, scoped, tag = 'input window, operand 0, single buffered']
    #allocation4 [shape = 's32[1]{0}', space=sflag, size = 0x4, scoped, tag = 'scoped memory for tpu_custom_call.1']
    #allocation5 [shape = 's32[1]{0}', space=sflag, size = 0x4, scoped, tag = 'scoped memory for tpu_custom_call.1']
    #allocation6 [shape = 'u8[32768]{0}', space=vmem, size = 0x8000, scoped, tag = 'input window, operand 1, single buffered']
    #allocation7 [shape = 's32[1]{0}', space=sflag, size = 0x4, scoped, tag = 'scoped memory for tpu_custom_call.1']
    #allocation8 [shape = 'u8[32768]{0}', space=vmem, size = 0x8000, scoped, tag = 'input window, operand 3, single buffered']
    #allocation9 [shape = 'u8[4096]{0}', space=vmem, size = 0x1000, scoped, tag = 'output window, operand 0, single buffered']
    %10 = vsyncpa [#allocation4], 0
    %11 = vsyncpa [#allocation7], 0
    %12 = vsyncpa [#allocation5], 0
    // Predicated region
    $region2: #{tpu_custom_call.1} parent=1 // pred_check
      _
    $region3: #{tpu_custom_call.1} parent=1 // pred_check_branch
      %14 = sbr.rel (0) target = $region5
    $region4: #{tpu_custom_call.1} parent=1 // pred_region
      %16 = vsyncadd [#allocation4], 0
      %s18 = sshll.u32 %s0, 4
      %s19 = int_to_ptr.hbm [resolvable:$true] %s18
      %s20 = sshll.u32 [#allocation3], 4
      %s21 = int_to_ptr.vmem [resolvable:$true] %s20
      %23 = dma.hbm_to_vmem [thread:$0]  %s19, 64, %s21, [#allocation4]
    $region5: #{tpu_custom_call.1} parent=1 // pred_fallthru
      _
    // Predicated region
    $region6: #{tpu_custom_call.1} parent=1 // pred_check
      _
    $region7: #{tpu_custom_call.1} parent=1 // pred_check_branch
      %25 = sbr.rel (0) target = $region9
    $region8: #{tpu_custom_call.1} parent=1 // pred_region
      %27 = vsyncadd [#allocation7], 0
      %s28 = sshll.u32 %s1, 4
      %s29 = int_to_ptr.hbm [resolvable:$true] %s28
      %s30 = sshll.u32 [#allocation6], 4
      %s31 = int_to_ptr.vmem [resolvable:$true] %s30
      %36 = dma.hbm_to_vmem [thread:$0]  %s29, 1024, %s31, [#allocation7], 64, 64, 4
    $region9: #{tpu_custom_call.1} parent=1 // pred_fallthru
      _
    // Predicated region
    $region10: #{tpu_custom_call.1} parent=1 // pred_check
      _
    $region11: #{tpu_custom_call.1} parent=1 // pred_check_branch
      %38 = sbr.rel (0) target = $region13
    $region12: #{tpu_custom_call.1} parent=1 // pred_region
      _
    $region13: #{tpu_custom_call.1} parent=1 // pred_fallthru
      _
    // Predicated region
    $region14: #{tpu_custom_call.1} parent=1 // pred_check
      _
    $region15: #{tpu_custom_call.1} parent=1 // pred_check_branch
      %40 = sbr.rel (0) target = $region17
    $region16: #{tpu_custom_call.1} parent=1 // pred_region
      %42 = vsyncadd [#allocation7], 0
      %s43 = sshll.u32 %s3, 4
      %s44 = int_to_ptr.hbm [resolvable:$true] %s43
      %s45 = sshll.u32 [#allocation8], 4
      %s46 = int_to_ptr.vmem [resolvable:$true] %s45
      %51 = dma.hbm_to_vmem [thread:$0]  %s44, 1024, %s46, [#allocation7], 64, 64, 4
    $region17: #{tpu_custom_call.1} parent=1 // pred_fallthru
      _
    // Predicated region
    $region18: #{tpu_custom_call.1} parent=1 // pred_check
      _
    $region19: #{tpu_custom_call.1} parent=1 // pred_check_branch
      %53 = sbr.rel (0) target = $region21
    $region20: #{tpu_custom_call.1} parent=1 // pred_region
      _
    $region21: #{tpu_custom_call.1} parent=1 // pred_fallthru
      _
    // Predicated region
    $region22: #{tpu_custom_call.1} parent=1 // pred_check
      _
    $region23: #{tpu_custom_call.1} parent=1 // pred_check_branch
      %55 = sbr.rel (0) target = $region25
    $region24: #{tpu_custom_call.1} parent=1 // pred_region
      %57 = dma.done [#allocation4], 64
    $region25: #{tpu_custom_call.1} parent=1 // pred_fallthru
      _
    // Predicated region
    $region26: #{tpu_custom_call.1} parent=1 // pred_check
      _
    $region27: #{tpu_custom_call.1} parent=1 // pred_check_branch
      %59 = sbr.rel (0) target = $region29
    $region28: #{tpu_custom_call.1} parent=1 // pred_region
      %61 = dma.done [#allocation7], 1024
    $region29: #{tpu_custom_call.1} parent=1 // pred_fallthru
      _
    // Predicated region
    $region30: #{tpu_custom_call.1} parent=1 // pred_check
      _
    $region31: #{tpu_custom_call.1} parent=1 // pred_check_branch
      %63 = sbr.rel (0) target = $region33
    $region32: #{tpu_custom_call.1} parent=1 // pred_region
      %65 = dma.done [#allocation7], 1024
    $region33: #{tpu_custom_call.1} parent=1 // pred_fallthru
      _
    %v66 = vld [vmem:[#allocation3] sm:$0xf]
    %v67 = vld [vmem:[#allocation6] sm:$0xf]
    %v68 = vld [vmem:[#allocation6 + $0x4] sm:$0xf]
    %v69 = vld [vmem:[#allocation6 + $0x8] sm:$0xf]
    %v70 = vld [vmem:[#allocation6 + $0xc] sm:$0xf]
    %v71 = vld [vmem:[#allocation6 + $0x10] sm:$0xf]
    %v72 = vld [vmem:[#allocation6 + $0x14] sm:$0xf]
    %v73 = vld [vmem:[#allocation6 + $0x18] sm:$0xf]
    %v74 = vld [vmem:[#allocation6 + $0x1c] sm:$0xf]
    %v75 = vld [vmem:[#allocation6 + $0x20] sm:$0xf]
    %v76 = vld [vmem:[#allocation6 + $0x24] sm:$0xf]
    %v77 = vld [vmem:[#allocation6 + $0x28] sm:$0xf]
    %v78 = vld [vmem:[#allocation6 + $0x2c] sm:$0xf]
    %v79 = vld [vmem:[#allocation6 + $0x30] sm:$0xf]
    %v80 = vld [vmem:[#allocation6 + $0x34] sm:$0xf]
    %v81 = vld [vmem:[#allocation6 + $0x38] sm:$0xf]
    %v82 = vld [vmem:[#allocation6 + $0x3c] sm:$0xf]
    %v83 = vld [vmem:[%s2] sm:$0x1]
    %v85 = vperm.slane %v83, 0
    %v103 = vunpack.c.l.b16 %v67
    %v104 = vunpack.c.l.b16 %v68
    %v105 = vunpack.c.l.b16 %v69
    %v106 = vunpack.c.l.b16 %v70
    %v107 = vunpack.c.l.b16 %v71
    %v108 = vunpack.c.l.b16 %v72
    %v109 = vunpack.c.l.b16 %v73
    %v110 = vunpack.c.l.b16 %v74
    %v111 = vunpack.c.l.b16 %v75
    %v112 = vunpack.c.l.b16 %v76
    %v113 = vunpack.c.l.b16 %v77
    %v114 = vunpack.c.l.b16 %v78
    %v115 = vunpack.c.l.b16 %v79
    %v116 = vunpack.c.l.b16 %v80
    %v117 = vunpack.c.l.b16 %v81
    %v118 = vunpack.c.l.b16 %v82
    %v119 = vpack.c.b16 %v104, %v103
    %v120 = vpack.c.b16 %v106, %v105
    %v121 = vpack.c.b16 %v108, %v107
    %v122 = vpack.c.b16 %v110, %v109
    %v123 = vpack.c.b16 %v112, %v111
    %v124 = vpack.c.b16 %v114, %v113
    %v125 = vpack.c.b16 %v116, %v115
    %v126 = vpack.c.b16 %v118, %v117
    %135 = vmatpush.bf16.xpose.msra.mxu0 %v126
    %136 = vmatpush.bf16.xpose.msra.mxu0 %v125
    %137 = vmatpush.bf16.xpose.msra.mxu0 %v124
    %138 = vmatpush.bf16.xpose.msra.mxu0 %v123
    %139 = vmatpush.bf16.xpose.msra.mxu0 %v122
    %140 = vmatpush.bf16.xpose.msra.mxu0 %v121
    %141 = vmatpush.bf16.xpose.msra.mxu0 %v120
    %142 = vmatpush.bf16.xpose.msra.mxu0 %v119
    %143 = vmatmul.bf16.gmra.mxu0 %v66
    %v144 = vpop.f32.mrf.mxu0
    %v145 = vadd.f32 %v85, %v144
    %v146 = vpop.f32.mrf.mxu0
    %147 = vdwg.mxu0
    %v148 = vmax.f32 %v145, 0.0
    %149 = vst [vmem:[#allocation2] sm:$0xff] %v148
    %v150 = vld [vmem:[#allocation2] sm:$0xff]
    %v151 = vpack.c.bf16 %v150, %v150
    %v152 = vld [vmem:[#allocation8] sm:$0xf]
    %v153 = vld [vmem:[#allocation8 + $0x4] sm:$0xf]
    %v154 = vld [vmem:[#allocation8 + $0x8] sm:$0xf]
    %v155 = vld [vmem:[#allocation8 + $0xc] sm:$0xf]
    %v156 = vld [vmem:[#allocation8 + $0x10] sm:$0xf]
    %v157 = vld [vmem:[#allocation8 + $0x14] sm:$0xf]
    %v158 = vld [vmem:[#allocation8 + $0x18] sm:$0xf]
    %v159 = vld [vmem:[#allocation8 + $0x1c] sm:$0xf]
    %v160 = vld [vmem:[#allocation8 + $0x20] sm:$0xf]
    %v161 = vld [vmem:[#allocation8 + $0x24] sm:$0xf]
    %v162 = vld [vmem:[#allocation8 + $0x28] sm:$0xf]
    %v163 = vld [vmem:[#allocation8 + $0x2c] sm:$0xf]
    %v164 = vld [vmem:[#allocation8 + $0x30] sm:$0xf]
    %v165 = vld [vmem:[#allocation8 + $0x34] sm:$0xf]
    %v166 = vld [vmem:[#allocation8 + $0x38] sm:$0xf]
    %v167 = vld [vmem:[#allocation8 + $0x3c] sm:$0xf]
    %v168 = vld [vmem:[%s4] sm:$0x1]
    %v170 = vperm.slane %v168, 0
    %v188 = vunpack.c.l.b16 %v152
    %v189 = vunpack.c.l.b16 %v153
    %v190 = vunpack.c.l.b16 %v154
    %v191 = vunpack.c.l.b16 %v155
    %v192 = vunpack.c.l.b16 %v156
    %v193 = vunpack.c.l.b16 %v157
    %v194 = vunpack.c.l.b16 %v158
    %v195 = vunpack.c.l.b16 %v159
    %v196 = vunpack.c.l.b16 %v160
    %v197 = vunpack.c.l.b16 %v161
    %v198 = vunpack.c.l.b16 %v162
    %v199 = vunpack.c.l.b16 %v163
    %v200 = vunpack.c.l.b16 %v164
    %v201 = vunpack.c.l.b16 %v165
    %v202 = vunpack.c.l.b16 %v166
    %v203 = vunpack.c.l.b16 %v167
    %v204 = vpack.c.b16 %v189, %v188
    %v205 = vpack.c.b16 %v191, %v190
    %v206 = vpack.c.b16 %v193, %v192
    %v207 = vpack.c.b16 %v195, %v194
    %v208 = vpack.c.b16 %v197, %v196
    %v209 = vpack.c.b16 %v199, %v198
    %v210 = vpack.c.b16 %v201, %v200
    %v211 = vpack.c.b16 %v203, %v202
    %220 = vmatpush.bf16.xpose.msra.mxu0 %v211
    %221 = vmatpush.bf16.xpose.msra.mxu0 %v210
    %222 = vmatpush.bf16.xpose.msra.mxu0 %v209
    %223 = vmatpush.bf16.xpose.msra.mxu0 %v208
    %224 = vmatpush.bf16.xpose.msra.mxu0 %v207
    %225 = vmatpush.bf16.xpose.msra.mxu0 %v206
    %226 = vmatpush.bf16.xpose.msra.mxu0 %v205
    %227 = vmatpush.bf16.xpose.msra.mxu0 %v204
    %228 = vmatmul.bf16.gmra.mxu0 %v151
    %v229 = vpop.f32.mrf.mxu0
    %v230 = vadd.f32 %v170, %v229
    %v231 = vpop.f32.mrf.mxu0
    %232 = vdwg.mxu0
    %233 = vst [vmem:[#allocation9] sm:$0xff] %v230
    // Predicated region
    $region34: #{tpu_custom_call.1} parent=1 // pred_check
      _
    $region35: #{tpu_custom_call.1} parent=1 // pred_check_branch
      %235 = sbr.rel (0) target = $region37
    $region36: #{tpu_custom_call.1} parent=1 // pred_region
      %237 = vsyncadd [#allocation5], 0
      %s239 = sshll.u32 [#allocation9], 4
      %s240 = int_to_ptr.vmem [resolvable:$true] %s239
      %s241 = sshll.u32 %s5, 4
      %s242 = int_to_ptr.hbm [resolvable:$true] %s241
      %244 = dma.vmem_to_hbm [thread:$0]  %s240, 128, %s242, [#allocation5]
    $region37: #{tpu_custom_call.1} parent=1 // pred_fallthru
      _
    // Predicated region
    $region38: #{tpu_custom_call.1} parent=1 // pred_check
      _
    $region39: #{tpu_custom_call.1} parent=1 // pred_check_branch
      %246 = sbr.rel (0) target = $region41
    $region40: #{tpu_custom_call.1} parent=1 // pred_region
      %248 = dma.done [#allocation5], 128
    $region41: #{tpu_custom_call.1} parent=1 // pred_fallthru
      _
    %249 = vsyncpa [#allocation4], 1
    %250 = vsyncpa [#allocation7], 1
    %251 = vsyncpa [#allocation5], 1

</llo_original>
